<compile_context>
chip_gen: v5e
topology: v5e:2x2
jax: 0.10.0
libtpu: 0.0.40
codegen_flags: <defaults>
</compile_context>

<pallas_src>
import functools

import jax
import jax.numpy as jnp
from jax import lax
from jax.experimental import pallas as pl
from jax.experimental.pallas import tpu as pltpu


def _round_up(a: int, b: int) -> int:
    return (a + b - 1) // b * b


def _cdiv(a: int, b: int) -> int:
    return (a + b - 1) // b


def _tpu_vmem_bytes() -> int:
    """Physical VMEM per TensorCore; conservative fallback if unavailable."""
    try:
        return int(pltpu.get_tpu_info().vmem_capacity_bytes)
    except Exception:
        return 64 * 1024 * 1024  # v7x-sized fallback; safe on every generation


def _classifier_kernel(x_ref, wt_ref, o_ref, scale_ref, *, temp: float,
                       eps: float, compute_dtype):
    # x_ref     : (TM, D)   rows of the feature matrix (held across j)
    # wt_ref    : (D, TN)   pre-transposed weight block (streamed over j)
    # o_ref     : (TM, TN)  logits tile (lane-dense: TN % 128 == 0)
    # scale_ref : (TM, 1)   f32 VMEM scratch: cached per-row 1/(||x|| * temp)

    # Compute the per-row scale only once per row tile (j == 0); it is reused
    # for every class tile of the same row tile (j axis is "arbitrary").
    @pl.when(pl.program_id(1) == 0)
    def _():
        xf = x_ref[...].astype(jnp.float32)
        sq = jnp.sum(xf * xf, axis=-1, keepdims=True)
        # F.normalize: x / max(||x||, eps); rsqrt goes to the EUP slot.
        inv_norm = jnp.where(sq > eps * eps, lax.rsqrt(sq), 1.0 / eps)
        scale_ref[...] = inv_norm * (1.0 / temp)

    # MXU matmul in native dtype (bf16 stays bf16, f32 stays f32), f32 accum.
    logits = jnp.dot(
        x_ref[...].astype(compute_dtype),
        wt_ref[...].astype(compute_dtype),
        preferred_element_type=jnp.float32)

    # Per-row scale applied to the f32 accumulator (mathematically identical
    # to normalizing x before the matmul, numerically slightly better).
    o_ref[...] = (logits * scale_ref[...]).astype(o_ref.dtype)


def res_classifier_mme_forward(x, weight, *, temp=0.05, norm=True,
                               return_feat=False, eps=1e-12,
                               compute_dtype=None, tm_max=None, tn_max=256):
    """Pallas implementation of ResClassifier_MME.forward (norm=True path).

    x      : (N, D) float array
    weight : (C, D) float array (same convention as nn.Linear.weight)
    """
    if return_feat:
        return x
    if not norm:
        # TODO(synk): norm=False branch (plain Linear with bias) is unused by
        # the default module config and not implemented here.
        raise NotImplementedError("norm=False path not implemented")

    n, d = x.shape
    c, d2 = weight.shape
    assert d == d2, "feature dims of x and weight must match"

    xb = jnp.dtype(x.dtype).itemsize
    wb = jnp.dtype(weight.dtype).itemsize
    ob = xb  # output dtype == input dtype

    # MXU compute dtype: never silently downcast f32 inputs to bf16.
    if compute_dtype is None:
        promoted = jnp.promote_types(x.dtype, weight.dtype)
        compute_dtype = jnp.bfloat16 if promoted == jnp.bfloat16 else jnp.float32

    # ---- generation-aware VMEM budget & tile caps -------------------------
    phys_vmem = _tpu_vmem_bytes()
    # ~45 MiB on v7x (64 MiB physical), ~90 MiB on v5e/v6e (128 MiB physical).
    vmem_limit = min(int(phys_vmem * 0.7), 96 * 1024 * 1024)
    tile_budget = int(vmem_limit * 0.8)

    # ---- class axis: lane-dense tiles --------------------------------------
    c_pad = _round_up(c, 128)
    tn = min(c_pad, int(tn_max))
    tn = max(128, (tn // 128) * 128)
    if c_pad % tn:
        c_pad = _round_up(c_pad, tn)

    # ---- row axis: biggest tile the double-buffered working set allows -----
    # working set ~ 2*tm*d*xb (x) + 2*d*tn*wb (weight) + 2*tm*tn*ob (out)
    #               + tm*128*4 (scale scratch, lane-padded)
    denom = 2 * d * xb + 2 * tn * ob + 512
    avail = tile_budget - 2 * d * tn * wb
    tm_cap = max(8, avail // denom) if avail > 0 else 8
    tm_cap = min(int(tm_cap), 1024)
    if tm_max is not None:
        tm_cap = min(tm_cap, int(tm_max))
    tm_cap = max(8, (tm_cap // 8) * 8)
    # TODO(synk): for very large D (>~4-8K) with tight VMEM (v7x), add a K (D)
    # grid axis with an f32 accumulator instead of shrinking tm further.

    n8 = _round_up(max(n, 8), 8)
    if n8 <= tm_cap:
        tm, n_pad = n8, n8                        # no extra row padding
    else:
        n_tiles = _cdiv(n8, tm_cap)               # minimize padded rows
        tm = _round_up(_cdiv(n8, n_tiles), 8)
        n_pad = tm * n_tiles

    # ---- padding / one-time weight transpose --------------------------------
    # Padded rows are all-zero -> scale guard keeps them finite -> zero logits.
    if n_pad != n:
        x = jnp.pad(x, ((0, n_pad - n), (0, 0)))
    if c_pad != c:
        weight = jnp.pad(weight, ((0, c_pad - c), (0, 0)))
    w_t = weight.T  # (D, C_pad): one HBM pass, amortized across all row tiles

    kernel = functools.partial(_classifier_kernel, temp=float(temp),
                               eps=float(eps), compute_dtype=compute_dtype)

    cost = pl.CostEstimate(
        flops=2 * n_pad * c_pad * d,
        bytes_accessed=(n_pad * d * xb
                        + (n_pad // tm) * c_pad * d * wb
                        + n_pad * c_pad * ob),
        transcendentals=0)

    out = pl.pallas_call(
        kernel,
        out_shape=jax.ShapeDtypeStruct((n_pad, c_pad), x.dtype),
        grid_spec=pltpu.PrefetchScalarGridSpec(
            num_scalar_prefetch=0,
            grid=(n_pad // tm, c_pad // tn),
            in_specs=[
                pl.BlockSpec((tm, d), lambda i, j: (i, 0)),   # x rows, held over j
                pl.BlockSpec((d, tn), lambda i, j: (0, j)),   # weight cols, streamed
            ],
            out_specs=pl.BlockSpec((tm, tn), lambda i, j: (i, j)),
            scratch_shapes=[pltpu.VMEM((tm, 1), jnp.float32)],
        ),
        compiler_params=pltpu.CompilerParams(
            # i parallel (megacore row-sharding on v7x); j arbitrary so the
            # cached per-row scale is legal across the class sweep.
            dimension_semantics=("parallel", "arbitrary"),
            vmem_limit_bytes=vmem_limit),
        cost_estimate=cost,
    )(x, w_t)

    return out[:n, :c]


def _reference_forward(x, weight, temp=0.05, eps=1e-12):
    x = x.astype(jnp.float32)
    norm = jnp.sqrt(jnp.sum(x * x, axis=-1, keepdims=True))
    x_n = x / jnp.maximum(norm, eps)
    return (x_n @ weight.T.astype(jnp.float32)) / temp


if __name__ == "__main__":
    key = jax.random.PRNGKey(0)
    kx, kw, kx2, kw2 = jax.random.split(key, 4)
    temp = 0.05

    # --- test 1: module defaults at small scale (batch=8, D=32, C=12, f32) ---
    N, D, C = 8, 32, 12
    x = jax.random.normal(kx, (N, D), dtype=jnp.float32)
    weight = 0.1 * jax.random.normal(kw, (C, D), dtype=jnp.float32)  # weights_init()
    out = jax.block_until_ready(res_classifier_mme_forward(x, weight, temp=temp))
    ref = _reference_forward(x, weight, temp=temp)
    assert out.shape == (N, C)
    assert jnp.allclose(out, ref, atol=5e-4, rtol=5e-4), "f32 mismatch vs reference"

    # --- test 2: multi-tile grid (exercises the cached scale across class
    #             tiles, row/class padding and the final slice) --------------
    N2, D2, C2 = 40, 64, 200
    x2 = jax.random.normal(kx2, (N2, D2), dtype=jnp.float32)
    w2 = 0.1 * jax.random.normal(kw2, (C2, D2), dtype=jnp.float32)
    out2 = jax.block_until_ready(
        res_classifier_mme_forward(x2, w2, temp=temp, tm_max=16, tn_max=128))
    ref2 = _reference_forward(x2, w2, temp=temp)
    assert out2.shape == (N2, C2)
    assert jnp.allclose(out2, ref2, atol=1e-3, rtol=1e-3), "multi-tile mismatch"

    # --- test 3: bf16 fast path (bf16 MXU operands, f32 accumulation) -------
    x_b = x.astype(jnp.bfloat16)
    w_b = weight.astype(jnp.bfloat16)
    out_b = jax.block_until_ready(res_classifier_mme_forward(x_b, w_b, temp=temp))
    ref_b = _reference_forward(x_b.astype(jnp.float32),
                               w_b.astype(jnp.float32), temp=temp)
    assert out_b.dtype == jnp.bfloat16
    assert jnp.allclose(out_b.astype(jnp.float32), ref_b,
                        atol=0.3, rtol=0.05), "bf16 mismatch vs reference"

    print("KERNEL_OK")
</pallas_src>

<mosaic_0001>
module attributes {stable_mosaic.version = 11 : i64} {
  func.func @_classifier_kernel(%arg0: i32, %arg1: i32, %arg2: memref<8x32xf32, #tpu.memory_space<vmem>>, %arg3: memref<32x128xf32, #tpu.memory_space<vmem>>, %arg4: memref<8x128xf32, #tpu.memory_space<vmem>>, %arg5: memref<8x1xf32, #tpu.memory_space<vmem>>) attributes {dimension_semantics = [#tpu.dimension_semantics<parallel>, #tpu.dimension_semantics<arbitrary>], iteration_bounds = array<i64: 1, 1>, scalar_prefetch = 0 : i64, scratch_operands = 1 : i64, tpu.core_type = #tpu.core_type<tc>, window_params = [{transform_indices = @transform_0, window_bounds = array<i64: 8, 32>}, {transform_indices = @transform_1, window_bounds = array<i64: 32, 128>}, {transform_indices = @transform_2, window_bounds = array<i64: 8, 128>}]} {
    %c0_i32 = arith.constant 0 : i32
    %0 = arith.cmpi eq, %arg1, %c0_i32 : i32
    %1 = arith.extui %0 : i1 to i32
    %c0_i32_0 = arith.constant 0 : i32
    %2 = arith.cmpi ne, %1, %c0_i32_0 : i32
    scf.if %2 {
      %c0_8 = arith.constant 0 : index
      %c0_9 = arith.constant 0 : index
      %10 = vector.load %arg2[%c0_8, %c0_9] : memref<8x32xf32, #tpu.memory_space<vmem>>, vector<8x32xf32>
      %11 = arith.mulf %10, %10 : vector<8x32xf32>
      %cst_10 = arith.constant dense<0.000000e+00> : vector<8xf32>
      %12 = vector.multi_reduction <add>, %11, %cst_10 [1] : vector<8x32xf32> to vector<8xf32>
      %13 = vector.shape_cast %12 : vector<8xf32> to vector<8x1xf32>
      %cst_11 = arith.constant 1.000000e-24 : f32
      %14 = vector.broadcast %cst_11 : f32 to vector<8x1xf32>
      %15 = arith.cmpf ogt, %13, %14 : vector<8x1xf32>
      %16 = math.rsqrt %13 : vector<8x1xf32>
      %cst_12 = arith.constant 9.99999995E+11 : f32
      %17 = vector.broadcast %cst_12 : f32 to vector<8x1xf32>
      %18 = arith.select %15, %16, %17 : vector<8x1xi1>, vector<8x1xf32>
      %cst_13 = arith.constant 2.000000e+01 : f32
      %19 = vector.broadcast %cst_13 : f32 to vector<8x1xf32>
      %20 = arith.mulf %18, %19 : vector<8x1xf32>
      %c0_14 = arith.constant 0 : index
      %c0_15 = arith.constant 0 : index
      %21 = vector.load %arg5[%c0_14, %c0_15] : memref<8x1xf32, #tpu.memory_space<vmem>>, vector<8x1xf32>
      tpu.vector_store %arg5[%c0_14, %c0_15], %20 {strides = array<i32>} : memref<8x1xf32, #tpu.memory_space<vmem>>, vector<8x1xf32>,
    } else {
    }
    %c0 = arith.constant 0 : index
    %c0_1 = arith.constant 0 : index
    %3 = vector.load %arg2[%c0, %c0_1] : memref<8x32xf32, #tpu.memory_space<vmem>>, vector<8x32xf32>
    %c0_2 = arith.constant 0 : index
    %c0_3 = arith.constant 0 : index
    %4 = vector.load %arg3[%c0_2, %c0_3] : memref<32x128xf32, #tpu.memory_space<vmem>>, vector<32x128xf32>
    %cst = arith.constant dense<0.000000e+00> : vector<8x128xf32>
    %5 = tpu.matmul %3, %4, %cst {dimension_numbers = #tpu.dot_dimension_numbers<[1], [0], [0], [1], [0, 0, 1, 1], [], []>} : vector<8x32xf32>, vector<32x128xf32>, vector<8x128xf32> -> vector<8x128xf32>
    %c0_4 = arith.constant 0 : index
    %c0_5 = arith.constant 0 : index
    %6 = vector.load %arg5[%c0_4, %c0_5] : memref<8x1xf32, #tpu.memory_space<vmem>>, vector<8x1xf32>
    %7 = vector.broadcast %6 : vector<8x1xf32> to vector<8x128xf32>
    %8 = arith.mulf %5, %7 : vector<8x128xf32>
    %c0_6 = arith.constant 0 : index
    %c0_7 = arith.constant 0 : index
    %9 = vector.load %arg4[%c0_6, %c0_7] : memref<8x128xf32, #tpu.memory_space<vmem>>, vector<8x128xf32>
    tpu.vector_store %arg4[%c0_6, %c0_7], %8 {strides = array<i32>} : memref<8x128xf32, #tpu.memory_space<vmem>>, vector<8x128xf32>,
    return
  }
  func.func @transform_0(%arg0: i32, %arg1: i32) -> (i32, i32) {
    %c0_i32 = arith.constant 0 : i32
    %c0_i32_0 = arith.constant 0 : i32
    return %arg0, %c0_i32 : i32, i32
  }
  func.func @transform_1(%arg0: i32, %arg1: i32) -> (i32, i32) {
    %c0_i32 = arith.constant 0 : i32
    %c0_i32_0 = arith.constant 0 : i32
    return %c0_i32, %arg1 : i32, i32
  }
  func.func @transform_2(%arg0: i32, %arg1: i32) -> (i32, i32) {
    %c0_i32 = arith.constant 0 : i32
    return %arg0, %arg1 : i32, i32
  }
}

</mosaic_0001>

<llo_original>
// kernel: tpu_custom_call.1
$region0: #{tpu_custom_call.1}
  #allocation0 [shape = 'u32[]', space=smem, size = 0x4, offset = 0x4, fixed_abs, tag = 'smem constant byte address 0x4 - core index']
  #allocation1 [shape = 'u32[72,128]{1,0:T(1,128)}', space=vmem, size = 0x9000, scoped, tag = 'internal scratch']
  #allocation2 [shape = 'f32[8,1]{1,0:T(8,128)}', space=vmem, size = 0x1000, scoped, tag = 'scratch operand']
  %s0 = inlined_call_operand.hbm [shape: f32[8,32], index: 0, kind: input, shape index: {}]
  %s1 = inlined_call_operand.hbm [shape: f32[32,128], index: 1, kind: input, shape index: {}]
  %s2 = inlined_call_operand.hbm [shape: f32[8,128], index: 2, kind: output, shape index: {}]
  %s3 = sld [smem:[#allocation0]]
  $region30: #{tpu_custom_call.1} parent=0
    _
  %s5 = ssub.s32 1, %s3
  %s6 = scalar_select 0, %s5, %s3
  $region1: #{tpu_custom_call.1} parent=0
    #allocation3 [shape = 'u8[4096]{0}', space=vmem, size = 0x1000, scoped, tag = 'input window, operand 0, single buffered']
    #allocation4 [shape = 's32[1]{0}', space=sflag, size = 0x4, scoped, tag = 'scoped memory for tpu_custom_call.1']
    #allocation5 [shape = 's32[1]{0}', space=sflag, size = 0x4, scoped, tag = 'scoped memory for tpu_custom_call.1']
    #allocation6 [shape = 'u8[16384]{0}', space=vmem, size = 0x4000, scoped, tag = 'input window, operand 1, single buffered']
    #allocation7 [shape = 's32[1]{0}', space=sflag, size = 0x4, scoped, tag = 'scoped memory for tpu_custom_call.1']
    #allocation8 [shape = 'u8[4096]{0}', space=vmem, size = 0x1000, scoped, tag = 'output window, operand 0, single buffered']
    %7 = vsyncpa [#allocation4], 0
    %8 = vsyncpa [#allocation7], 0
    %9 = vsyncpa [#allocation5], 0
    // Predicated region
    $region2: #{tpu_custom_call.1} parent=1 // pred_check
      _
    $region3: #{tpu_custom_call.1} parent=1 // pred_check_branch
      %11 = sbr.rel (0) target = $region5
    $region4: #{tpu_custom_call.1} parent=1 // pred_region
      %13 = vsyncadd [#allocation4], 0
      %s15 = sshll.u32 %s0, 4
      %s16 = int_to_ptr.hbm [resolvable:$true] %s15
      %s17 = sshll.u32 [#allocation3], 4
      %s18 = int_to_ptr.vmem [resolvable:$true] %s17
      %20 = dma.hbm_to_vmem [thread:$0]  %s16, 128, %s18, [#allocation4]
    $region5: #{tpu_custom_call.1} parent=1 // pred_fallthru
      _
    // Predicated region
    $region6: #{tpu_custom_call.1} parent=1 // pred_check
      _
    $region7: #{tpu_custom_call.1} parent=1 // pred_check_branch
      %22 = sbr.rel (0) target = $region9
    $region8: #{tpu_custom_call.1} parent=1 // pred_region
      %24 = vsyncadd [#allocation7], 0
      %s25 = sshll.u32 %s1, 4
      %s26 = int_to_ptr.hbm [resolvable:$true] %s25
      %s27 = sshll.u32 [#allocation6], 4
      %s28 = int_to_ptr.vmem [resolvable:$true] %s27
      %33 = dma.hbm_to_vmem [thread:$0]  %s26, 512, %s28, [#allocation7], 128, 128, 8
    $region9: #{tpu_custom_call.1} parent=1 // pred_fallthru
      _
    // Predicated region
    $region10: #{tpu_custom_call.1} parent=1 // pred_check
      _
    $region11: #{tpu_custom_call.1} parent=1 // pred_check_branch
      %35 = sbr.rel (0) target = $region13
    $region12: #{tpu_custom_call.1} parent=1 // pred_region
      %37 = dma.done [#allocation4], 128
    $region13: #{tpu_custom_call.1} parent=1 // pred_fallthru
      _
    // Predicated region
    $region14: #{tpu_custom_call.1} parent=1 // pred_check
      _
    $region15: #{tpu_custom_call.1} parent=1 // pred_check_branch
      %39 = sbr.rel (0) target = $region17
    $region16: #{tpu_custom_call.1} parent=1 // pred_region
      %41 = dma.done [#allocation7], 512
    $region17: #{tpu_custom_call.1} parent=1 // pred_fallthru
      _
    %p42 = scmp.eq.s32.totalorder 0, 0
    // Predicated region
    $region18: #{tpu_custom_call.1} parent=1 // pred_check
      %p43 = pneg %p42
    $region19: #{tpu_custom_call.1} parent=1 // pred_check_branch
      %45 = sbr.rel (%p43) target = $region21
    $region20: #{tpu_custom_call.1} parent=1 // pred_region
      %v46 = vld [vmem:[#allocation3] sm:$0xff]
      %v47 = vmul.f32 %v46, %v46
      %vm48 = vcmask 261120
      %v49 = vsel %vm48, %v47, 0.0
      %50 = vadd.xlane.f32.xlu0 %v49
      %v51 = vpop.xlane.xlu0 %50
      %vm52 = vcmp.gt.f32.partialorder %v51, 1e-24
      %v53 = vrsqrt.pop %v51
      %v54 = vmul.f32 %v53, %v51
      %v55 = vmul.f32 %v54, %v53
      %v56 = vmul.f32 0.5, %v55
      %v57 = vsub.f32 1.5, %v56
      %v58 = vmul.f32 %v53, %v57
      %vm59 = vweird.f32 %v51
      %vm60 = vweird.f32 %v53
      %vm61 = vmor %vm59, %vm60
      %v62 = vsel %vm61, %v53, %v58
      %v63 = vsel %vm52, %v62, 1e+12
      %v64 = vmul.f32 %v63, 20.0
      %vm65 = vcmask 7168
      %66 = vst.msk [vmem:[#allocation2] sm:$0xff] %vm65, %v64
    $region21: #{tpu_custom_call.1} parent=1 // pred_fallthru
      _
    %v67 = vld [vmem:[#allocation3] sm:$0xff]
    %v68 = vld [vmem:[#allocation6] sm:$0xff]
    %v69 = vld [vmem:[#allocation6 + $0x8] sm:$0xff]
    %v70 = vld [vmem:[#allocation6 + $0x10] sm:$0xff]
    %v71 = vld [vmem:[#allocation6 + $0x18] sm:$0xff]
    %vm72 = vcmask 261120
    %v74 = vsel %vm72, %v67, 0
    %76 = vmatpush.msra.mxu0 0.0
    %77 = vmatpush.msra.mxu0 0.0
    %78 = vmatpush.msra.mxu0 0.0
    %79 = vmatpush.msra.mxu0 0.0
    %80 = vmatpush.msra.mxu0 0.0
    %81 = vmatpush.msra.mxu0 0.0
    %82 = vmatpush.msra.mxu0 0.0
    %83 = vmatpush.msra.mxu0 0.0
    %84 = vmatpush.msra.mxu0 0.0
    %85 = vmatpush.msra.mxu0 0.0
    %86 = vmatpush.msra.mxu0 0.0
    %87 = vmatpush.msra.mxu0 0.0
    %88 = vmatpush.msra.mxu0 %v71
    %89 = vmatpush.msra.mxu0 %v70
    %90 = vmatpush.msra.mxu0 %v69
    %91 = vmatpush.msra.mxu0 %v68
    %92 = vmatmul.f32.gmra.mxu0 %v74
    %v93 = vpop.f32.mrf.mxu0
    %v94 = vadd.f32 0.0, %v93
    %95 = vdwg.mxu0
    %v96 = vld [vmem:[#allocation2] sm:$0xff]
    %98 = vset.pattern.permute.xlu0 0
    %99 = vperm.xlu0 %98, %v96
    %v100 = vpop.permute.xlu0 %99
    %v102 = vmul.f32 %v94, %v100
    %103 = vst [vmem:[#allocation8] sm:$0xff] %v102
    // Predicated region
    $region22: #{tpu_custom_call.1} parent=1 // pred_check
      _
    $region23: #{tpu_custom_call.1} parent=1 // pred_check_branch
      %105 = sbr.rel (0) target = $region25
    $region24: #{tpu_custom_call.1} parent=1 // pred_region
      %107 = vsyncadd [#allocation5], 0
      %s109 = sshll.u32 [#allocation8], 4
      %s110 = int_to_ptr.vmem [resolvable:$true] %s109
      %s111 = sshll.u32 %s2, 4
      %s112 = int_to_ptr.hbm [resolvable:$true] %s111
      %114 = dma.vmem_to_hbm [thread:$0]  %s110, 128, %s112, [#allocation5]
    $region25: #{tpu_custom_call.1} parent=1 // pred_fallthru
      _
    // Predicated region
    $region26: #{tpu_custom_call.1} parent=1 // pred_check
      _
    $region27: #{tpu_custom_call.1} parent=1 // pred_check_branch
      %116 = sbr.rel (0) target = $region29
    $region28: #{tpu_custom_call.1} parent=1 // pred_region
      %118 = dma.done [#allocation5], 128
    $region29: #{tpu_custom_call.1} parent=1 // pred_fallthru
      _
    %119 = vsyncpa [#allocation4], 1
    %120 = vsyncpa [#allocation7], 1
    %121 = vsyncpa [#allocation5], 1

</llo_original>
